<compile_context>
chip_gen: v5e
topology: v5e:2x2
jax: 0.10.0
libtpu: 0.0.40
codegen_flags: <defaults>
</compile_context>

<pallas_src>
import jax
import jax.numpy as jnp
from jax.experimental import pallas as pl
from jax.experimental.pallas import tpu as pltpu

PACK = 8  # logical rows packed per lane-row (8 * n_features(=16) = 128 lanes)


def _round_up(x, m):
    return (x + m - 1) // m * m


def bone_mlp_kernel(bone_ref, feat_ref, w1a_ref, w1b_ref, b1_ref,
                    w2_ref, b2_ref, o_ref):
    # Packed layout: each row holds PACK logical rows side by side.
    #   bone: [TB, PACK*bone_dim]      feat: [TB, PACK*feat_dim]
    #   w1a:  [PACK*bone_dim, PACK*n]  w1b:  [PACK*feat_dim, PACK*n]   (block-diag)
    #   b1:   [1, PACK*n]              w2:   [PACK*n, PACK*feat_dim]   (block-diag)
    #   b2:   [1, PACK*feat_dim]
    # Fused concat: [bone | feat] @ W1 == bone @ W1[:bd] + feat @ W1[bd:].
    h = (jnp.dot(bone_ref[...].astype(w1a_ref.dtype), w1a_ref[...],
                 preferred_element_type=jnp.float32)
         + jnp.dot(feat_ref[...].astype(w1b_ref.dtype), w1b_ref[...],
                   preferred_element_type=jnp.float32)
         + b1_ref[...])
    h = jnp.maximum(h, 0.0)                                   # ReLU, f32 VPU
    y = jnp.dot(h.astype(w2_ref.dtype), w2_ref[...],
                preferred_element_type=jnp.float32) + b2_ref[...]
    o_ref[...] = jnp.maximum(y, 0.0).astype(o_ref.dtype)      # dense 96-lane store


def init_params(key, bone_dim, bone_feature_dim, dtype=jnp.float32):
    """PyTorch-style init (uniform +-1/sqrt(fan_in)); weights stored [in, out]."""
    n = bone_dim + bone_feature_dim
    k1, k2, k3, k4 = jax.random.split(key, 4)
    lim = 1.0 / jnp.sqrt(jnp.array(n, dtype))
    w1 = jax.random.uniform(k1, (n, n), dtype, -lim, lim)
    b1 = jax.random.uniform(k2, (1, n), dtype, -lim, lim)
    w2 = jax.random.uniform(k3, (n, bone_feature_dim), dtype, -lim, lim)
    b2 = jax.random.uniform(k4, (1, bone_feature_dim), dtype, -lim, lim)
    return w1, b1, w2, b2


def prepare_params(params, bone_dim, compute_dtype=None):
    """One-time prep: block-diagonal (PACK-way) weights + tiled biases.

    compute_dtype=jnp.bfloat16 stores the (tiny, VMEM-resident) weight blocks
    in bf16; biases stay f32 so the bias-add/ReLU epilogue runs in f32.
    """
    w1, b1, w2, b2 = params
    n = w1.shape[0]
    feat_dim = w2.shape[1]
    assert n == bone_dim + feat_dim
    eye = jnp.eye(PACK, dtype=w1.dtype)
    w1a_bd = jnp.kron(eye, w1[:bone_dim])          # [PACK*bone_dim, PACK*n]
    w1b_bd = jnp.kron(eye, w1[bone_dim:])          # [PACK*feat_dim, PACK*n]
    w2_bd = jnp.kron(eye, w2)                      # [PACK*n, PACK*feat_dim]
    b1_t = jnp.tile(b1.reshape(1, n), (1, PACK)).astype(jnp.float32)
    b2_t = jnp.tile(b2.reshape(1, feat_dim), (1, PACK)).astype(jnp.float32)
    if compute_dtype is not None:
        w1a_bd = w1a_bd.astype(compute_dtype)
        w1b_bd = w1b_bd.astype(compute_dtype)
        w2_bd = w2_bd.astype(compute_dtype)
    return (w1a_bd, w1b_bd, b1_t, w2_bd, b2_t)


def bone_mlp(bone, bone_feature, prepared_params, *, block_rows=4096):
    """bone: [B, bone_dim], bone_feature: [B, feat_dim] -> [B, feat_dim].

    Stack all bones sharing these weights into one call so the batch grid
    amortizes per-step overhead.  For bf16 streaming on v6e/v7x pass bf16
    inputs (and bf16 weights via prepare_params(compute_dtype=...)).
    """
    w1a, w1b, b1, w2, b2 = prepared_params
    batch, bone_dim = bone.shape
    feat_dim = bone_feature.shape[1]
    assert w1a.shape[0] == PACK * bone_dim

    # Pad at most PACK-1 rows so the free row-major reshape into packed rows
    # works; no padding at all when batch % 8 == 0 (the common case).
    b8 = _round_up(max(batch, 1), PACK)
    if b8 != batch:
        bone = jnp.pad(bone, ((0, b8 - batch), (0, 0)))
        bone_feature = jnp.pad(bone_feature, ((0, b8 - batch), (0, 0)))

    bp = b8 // PACK                       # packed rows
    pb = PACK * bone_dim                  # e.g. 32
    pf = PACK * feat_dim                  # e.g. 96
    bone_p = bone.reshape(bp, pb)         # free row-major reshape
    feat_p = bone_feature.reshape(bp, pf)

    # Batch tile in packed rows.  Big tiles amortize the ~0.35us/step pipeline
    # overhead; keep >= 2 grid steps when the batch allows so the "parallel"
    # axis shards across both v7x TensorCores (harmless on v5e/v6e).
    tb_target = max(8, _round_up(block_rows // PACK, 8))
    if bp < 16:
        tb = bp                                           # single full-dim tile
    else:
        tb = min(tb_target, _round_up(pl.cdiv(bp, 2), 8))  # >= 2 steps
    grid = (pl.cdiv(bp, tb),)                             # partial last tile OK

    def row_spec(cols):
        return pl.BlockSpec((tb, cols), lambda i: (i, 0))

    def resident_spec(shape):
        # Same block every step -> stays VMEM-resident across the grid.
        return pl.BlockSpec(shape, lambda i: (0, 0))

    out_p = pl.pallas_call(
        bone_mlp_kernel,
        out_shape=jax.ShapeDtypeStruct((bp, pf), bone.dtype),
        grid=grid,
        in_specs=[
            row_spec(pb),
            row_spec(pf),
            resident_spec(w1a.shape),
            resident_spec(w1b.shape),
            resident_spec(b1.shape),
            resident_spec(w2.shape),
            resident_spec(b2.shape),
        ],
        out_specs=row_spec(pf),
        compiler_params=pltpu.CompilerParams(
            dimension_semantics=("parallel",),      # megacore split on v7x
            # Streaming blocks are < 1 MiB double-buffered + ~0.1 MiB weights;
            # explicit limit keeps larger caller-chosen tiles portable to
            # v7x's 64 MiB physical VMEM (32 MiB default scoped).
            vmem_limit_bytes=32 * 1024 * 1024,
        ),
    )(bone_p, feat_p, w1a, w1b, b1, w2, b2)

    out = out_p.reshape(b8, feat_dim)     # free reshape back to logical rows
    if b8 != batch:
        out = out[:batch]
    return out


def bone_mlp_ref(bone, bone_feature, params):
    w1, b1, w2, b2 = params
    x = jnp.concatenate([bone, bone_feature], axis=-1)
    h = jnp.maximum(x @ w1 + b1, 0.0)
    return jnp.maximum(h @ w2 + b2, 0.0)


if __name__ == "__main__":
    bone_dim = 4
    bone_feature_dim = 12   # n_features = 16

    key = jax.random.PRNGKey(0)
    kp, kb, kf = jax.random.split(key, 3)
    params = init_params(kp, bone_dim, bone_feature_dim)
    prepared = prepare_params(params, bone_dim)   # f32 weights (demo)

    # Case 1: one packed tile (batch == PACK) — typical small per-bone call.
    batch = 8
    bone = jax.random.normal(kb, (batch, bone_dim), jnp.float32)
    feat = jax.random.normal(kf, (batch, bone_feature_dim), jnp.float32)
    out = jax.block_until_ready(bone_mlp(bone, feat, prepared))
    ref = bone_mlp_ref(bone, feat, params)
    assert out.shape == (batch, bone_feature_dim)
    assert jnp.allclose(out, ref, atol=1e-4, rtol=1e-4)

    # Case 2: larger, non-multiple-of-8 batch -> pads only 4 rows, multi-step
    # grid (megacore on v7x) with a partial final tile handled by Pallas.
    batch2 = 300
    kb2, kf2 = jax.random.split(jax.random.PRNGKey(1))
    bone2 = jax.random.normal(kb2, (batch2, bone_dim), jnp.float32)
    feat2 = jax.random.normal(kf2, (batch2, bone_feature_dim), jnp.float32)
    out2 = jax.block_until_ready(bone_mlp(bone2, feat2, prepared, block_rows=128))
    ref2 = bone_mlp_ref(bone2, feat2, params)
    assert out2.shape == (batch2, bone_feature_dim)
    assert jnp.allclose(out2, ref2, atol=1e-4, rtol=1e-4)

    print("KERNEL_OK")
</pallas_src>

<mosaic_0001>
module attributes {stable_mosaic.version = 11 : i64} {
  func.func @bone_mlp_kernel(%arg0: i32, %arg1: memref<1x32xf32, #tpu.memory_space<vmem>>, %arg2: memref<1x96xf32, #tpu.memory_space<vmem>>, %arg3: memref<32x128xf32, #tpu.memory_space<vmem>>, %arg4: memref<96x128xf32, #tpu.memory_space<vmem>>, %arg5: memref<1x128xf32, #tpu.memory_space<vmem>>, %arg6: memref<128x96xf32, #tpu.memory_space<vmem>>, %arg7: memref<1x96xf32, #tpu.memory_space<vmem>>, %arg8: memref<1x96xf32, #tpu.memory_space<vmem>>) attributes {dimension_semantics = [#tpu.dimension_semantics<parallel>], iteration_bounds = array<i64: 1>, scalar_prefetch = 0 : i64, scratch_operands = 0 : i64, tpu.core_type = #tpu.core_type<tc>, window_params = [{transform_indices = @transform_0, window_bounds = array<i64: 1, 32>}, {transform_indices = @transform_1, window_bounds = array<i64: 1, 96>}, {pipeline_mode = #tpu.pipeline_mode<synchronous>, transform_indices = @transform_2, window_bounds = array<i64: 32, 128>}, {pipeline_mode = #tpu.pipeline_mode<synchronous>, transform_indices = @transform_3, window_bounds = array<i64: 96, 128>}, {pipeline_mode = #tpu.pipeline_mode<synchronous>, transform_indices = @transform_4, window_bounds = array<i64: 1, 128>}, {pipeline_mode = #tpu.pipeline_mode<synchronous>, transform_indices = @transform_5, window_bounds = array<i64: 128, 96>}, {pipeline_mode = #tpu.pipeline_mode<synchronous>, transform_indices = @transform_6, window_bounds = array<i64: 1, 96>}, {transform_indices = @transform_7, window_bounds = array<i64: 1, 96>}]} {
    %c0 = arith.constant 0 : index
    %c0_0 = arith.constant 0 : index
    %0 = vector.load %arg1[%c0, %c0_0] : memref<1x32xf32, #tpu.memory_space<vmem>>, vector<1x32xf32>
    %c0_1 = arith.constant 0 : index
    %c0_2 = arith.constant 0 : index
    %1 = vector.load %arg3[%c0_1, %c0_2] : memref<32x128xf32, #tpu.memory_space<vmem>>, vector<32x128xf32>
    %cst = arith.constant dense<0.000000e+00> : vector<1x128xf32>
    %2 = tpu.matmul %0, %1, %cst {dimension_numbers = #tpu.dot_dimension_numbers<[1], [0], [0], [1], [0, 0, 1, 1], [], []>} : vector<1x32xf32>, vector<32x128xf32>, vector<1x128xf32> -> vector<1x128xf32>
    %c0_3 = arith.constant 0 : index
    %c0_4 = arith.constant 0 : index
    %3 = vector.load %arg2[%c0_3, %c0_4] : memref<1x96xf32, #tpu.memory_space<vmem>>, vector<1x96xf32>
    %c0_5 = arith.constant 0 : index
    %c0_6 = arith.constant 0 : index
    %4 = vector.load %arg4[%c0_5, %c0_6] : memref<96x128xf32, #tpu.memory_space<vmem>>, vector<96x128xf32>
    %cst_7 = arith.constant dense<0.000000e+00> : vector<1x128xf32>
    %5 = tpu.matmul %3, %4, %cst_7 {dimension_numbers = #tpu.dot_dimension_numbers<[1], [0], [0], [1], [0, 0, 1, 1], [], []>} : vector<1x96xf32>, vector<96x128xf32>, vector<1x128xf32> -> vector<1x128xf32>
    %6 = arith.addf %2, %5 : vector<1x128xf32>
    %c0_8 = arith.constant 0 : index
    %c0_9 = arith.constant 0 : index
    %7 = vector.load %arg5[%c0_8, %c0_9] : memref<1x128xf32, #tpu.memory_space<vmem>>, vector<1x128xf32>
    %8 = arith.addf %6, %7 : vector<1x128xf32>
    %cst_10 = arith.constant 0.000000e+00 : f32
    %9 = vector.broadcast %cst_10 : f32 to vector<1x128xf32>
    %10 = arith.maximumf %8, %9 : vector<1x128xf32>
    %c0_11 = arith.constant 0 : index
    %c0_12 = arith.constant 0 : index
    %11 = vector.load %arg6[%c0_11, %c0_12] : memref<128x96xf32, #tpu.memory_space<vmem>>, vector<128x96xf32>
    %cst_13 = arith.constant dense<0.000000e+00> : vector<1x96xf32>
    %12 = tpu.matmul %10, %11, %cst_13 {dimension_numbers = #tpu.dot_dimension_numbers<[1], [0], [0], [1], [0, 0, 1, 1], [], []>} : vector<1x128xf32>, vector<128x96xf32>, vector<1x96xf32> -> vector<1x96xf32>
    %c0_14 = arith.constant 0 : index
    %c0_15 = arith.constant 0 : index
    %13 = vector.load %arg7[%c0_14, %c0_15] : memref<1x96xf32, #tpu.memory_space<vmem>>, vector<1x96xf32>
    %14 = arith.addf %12, %13 : vector<1x96xf32>
    %cst_16 = arith.constant 0.000000e+00 : f32
    %15 = vector.broadcast %cst_16 : f32 to vector<1x96xf32>
    %16 = arith.maximumf %14, %15 : vector<1x96xf32>
    %c0_17 = arith.constant 0 : index
    %c0_18 = arith.constant 0 : index
    %17 = vector.load %arg8[%c0_17, %c0_18] : memref<1x96xf32, #tpu.memory_space<vmem>>, vector<1x96xf32>
    tpu.vector_store %arg8[%c0_17, %c0_18], %16 {strides = array<i32>} : memref<1x96xf32, #tpu.memory_space<vmem>>, vector<1x96xf32>,
    return
  }
  func.func @transform_0(%arg0: i32) -> (i32, i32) {
    %c0_i32 = arith.constant 0 : i32
    %c0_i32_0 = arith.constant 0 : i32
    return %arg0, %c0_i32 : i32, i32
  }
  func.func @transform_1(%arg0: i32) -> (i32, i32) {
    %c0_i32 = arith.constant 0 : i32
    %c0_i32_0 = arith.constant 0 : i32
    return %arg0, %c0_i32 : i32, i32
  }
  func.func @transform_2(%arg0: i32) -> (i32, i32) {
    %c0_i32 = arith.constant 0 : i32
    %c0_i32_0 = arith.constant 0 : i32
    %c0_i32_1 = arith.constant 0 : i32
    return %c0_i32, %c0_i32_0 : i32, i32
  }
  func.func @transform_3(%arg0: i32) -> (i32, i32) {
    %c0_i32 = arith.constant 0 : i32
    %c0_i32_0 = arith.constant 0 : i32
    %c0_i32_1 = arith.constant 0 : i32
    return %c0_i32, %c0_i32_0 : i32, i32
  }
  func.func @transform_4(%arg0: i32) -> (i32, i32) {
    %c0_i32 = arith.constant 0 : i32
    %c0_i32_0 = arith.constant 0 : i32
    %c0_i32_1 = arith.constant 0 : i32
    return %c0_i32, %c0_i32_0 : i32, i32
  }
  func.func @transform_5(%arg0: i32) -> (i32, i32) {
    %c0_i32 = arith.constant 0 : i32
    %c0_i32_0 = arith.constant 0 : i32
    %c0_i32_1 = arith.constant 0 : i32
    return %c0_i32, %c0_i32_0 : i32, i32
  }
  func.func @transform_6(%arg0: i32) -> (i32, i32) {
    %c0_i32 = arith.constant 0 : i32
    %c0_i32_0 = arith.constant 0 : i32
    %c0_i32_1 = arith.constant 0 : i32
    return %c0_i32, %c0_i32_0 : i32, i32
  }
  func.func @transform_7(%arg0: i32) -> (i32, i32) {
    %c0_i32 = arith.constant 0 : i32
    %c0_i32_0 = arith.constant 0 : i32
    return %arg0, %c0_i32 : i32, i32
  }
}

</mosaic_0001>

<llo_original>
// kernel: tpu_custom_call.1
$region0: #{tpu_custom_call.1}
  #allocation0 [shape = 'u32[]', space=smem, size = 0x4, offset = 0x4, fixed_abs, tag = 'smem constant byte address 0x4 - core index']
  #allocation1 [shape = 'u32[72,128]{1,0:T(1,128)}', space=vmem, size = 0x9000, scoped, tag = 'internal scratch']
  %s0 = inlined_call_operand.vmem [shape: f32[1,32], index: 0, kind: input, shape index: {}]
  %s1 = inlined_call_operand.vmem [shape: f32[1,96], index: 1, kind: input, shape index: {}]
  %s2 = inlined_call_operand.vmem [shape: f32[32,128], index: 2, kind: input, shape index: {}]
  %s3 = inlined_call_operand.vmem [shape: f32[96,128], index: 3, kind: input, shape index: {}]
  %s4 = inlined_call_operand.vmem [shape: f32[1,128], index: 4, kind: input, shape index: {}]
  %s5 = inlined_call_operand.vmem [shape: f32[128,96], index: 5, kind: input, shape index: {}]
  %s6 = inlined_call_operand.vmem [shape: f32[1,96], index: 6, kind: input, shape index: {}]
  %s7 = inlined_call_operand.hbm [shape: f32[1,96], index: 7, kind: output, shape index: {}]
  %s8 = sld [smem:[#allocation0]]
  $region38: #{tpu_custom_call.1} parent=0
    _
  %s10 = ssub.s32 1, %s8
  %s11 = scalar_select 0, %s10, %s8
  $region1: #{tpu_custom_call.1} parent=0
    #allocation2 [shape = 'u8[512]{0}', space=vmem, size = 0x400, scoped, tag = 'output window, operand 0, single buffered']
    #allocation3 [shape = 's32[1]{0}', space=sflag, size = 0x4, scoped, tag = 'scoped memory for tpu_custom_call.1']
    %12 = vsyncpa [#allocation3], 0
    // Predicated region
    $region2: #{tpu_custom_call.1} parent=1 // pred_check
      _
    $region3: #{tpu_custom_call.1} parent=1 // pred_check_branch
      %14 = sbr.rel (0) target = $region5
    $region4: #{tpu_custom_call.1} parent=1 // pred_region
      _
    $region5: #{tpu_custom_call.1} parent=1 // pred_fallthru
      _
    // Predicated region
    $region6: #{tpu_custom_call.1} parent=1 // pred_check
      _
    $region7: #{tpu_custom_call.1} parent=1 // pred_check_branch
      %16 = sbr.rel (0) target = $region9
    $region8: #{tpu_custom_call.1} parent=1 // pred_region
      _
    $region9: #{tpu_custom_call.1} parent=1 // pred_fallthru
      _
    // Predicated region
    $region10: #{tpu_custom_call.1} parent=1 // pred_check
      _
    $region11: #{tpu_custom_call.1} parent=1 // pred_check_branch
      %18 = sbr.rel (0) target = $region13
    $region12: #{tpu_custom_call.1} parent=1 // pred_region
      _
    $region13: #{tpu_custom_call.1} parent=1 // pred_fallthru
      _
    // Predicated region
    $region14: #{tpu_custom_call.1} parent=1 // pred_check
      _
    $region15: #{tpu_custom_call.1} parent=1 // pred_check_branch
      %20 = sbr.rel (0) target = $region17
    $region16: #{tpu_custom_call.1} parent=1 // pred_region
      _
    $region17: #{tpu_custom_call.1} parent=1 // pred_fallthru
      _
    // Predicated region
    $region18: #{tpu_custom_call.1} parent=1 // pred_check
      _
    $region19: #{tpu_custom_call.1} parent=1 // pred_check_branch
      %22 = sbr.rel (0) target = $region21
    $region20: #{tpu_custom_call.1} parent=1 // pred_region
      _
    $region21: #{tpu_custom_call.1} parent=1 // pred_fallthru
      _
    // Predicated region
    $region22: #{tpu_custom_call.1} parent=1 // pred_check
      _
    $region23: #{tpu_custom_call.1} parent=1 // pred_check_branch
      %24 = sbr.rel (0) target = $region25
    $region24: #{tpu_custom_call.1} parent=1 // pred_region
      _
    $region25: #{tpu_custom_call.1} parent=1 // pred_fallthru
      _
    // Predicated region
    $region26: #{tpu_custom_call.1} parent=1 // pred_check
      _
    $region27: #{tpu_custom_call.1} parent=1 // pred_check_branch
      %26 = sbr.rel (0) target = $region29
    $region28: #{tpu_custom_call.1} parent=1 // pred_region
      _
    $region29: #{tpu_custom_call.1} parent=1 // pred_fallthru
      _
    %v27 = vld [vmem:[%s0] sm:$0x1]
    %v28 = vld [vmem:[%s2] sm:$0xff]
    %v29 = vld [vmem:[%s2 + $0x8] sm:$0xff]
    %v30 = vld [vmem:[%s2 + $0x10] sm:$0xff]
    %v31 = vld [vmem:[%s2 + $0x18] sm:$0xff]
    %v32 = vld [vmem:[%s1] sm:$0x1]
    %v33 = vld [vmem:[%s3] sm:$0xff]
    %v34 = vld [vmem:[%s3 + $0x8] sm:$0xff]
    %v35 = vld [vmem:[%s3 + $0x10] sm:$0xff]
    %v36 = vld [vmem:[%s3 + $0x18] sm:$0xff]
    %v37 = vld [vmem:[%s3 + $0x20] sm:$0xff]
    %v38 = vld [vmem:[%s3 + $0x28] sm:$0xff]
    %v39 = vld [vmem:[%s3 + $0x30] sm:$0xff]
    %v40 = vld [vmem:[%s3 + $0x38] sm:$0xff]
    %v41 = vld [vmem:[%s3 + $0x40] sm:$0xff]
    %v42 = vld [vmem:[%s3 + $0x48] sm:$0xff]
    %v43 = vld [vmem:[%s3 + $0x50] sm:$0xff]
    %v44 = vld [vmem:[%s3 + $0x58] sm:$0xff]
    %vm45 = vcmask 785408
    %v47 = vsel %vm45, %v32, 0
    %49 = vmatpush.msra.mxu0 0.0
    %50 = vmatpush.msra.mxu0 0.0
    %51 = vmatpush.msra.mxu0 0.0
    %52 = vmatpush.msra.mxu0 0.0
    %53 = vmatpush.msra.mxu0 %v44
    %54 = vmatpush.msra.mxu0 %v43
    %55 = vmatpush.msra.mxu0 %v42
    %56 = vmatpush.msra.mxu0 %v41
    %57 = vmatpush.msra.mxu0 %v40
    %58 = vmatpush.msra.mxu0 %v39
    %59 = vmatpush.msra.mxu0 %v38
    %60 = vmatpush.msra.mxu0 %v37
    %61 = vmatpush.msra.mxu0 %v36
    %62 = vmatpush.msra.mxu0 %v35
    %63 = vmatpush.msra.mxu0 %v34
    %64 = vmatpush.msra.mxu0 %v33
    %65 = vmatmul.f32.gmra.mxu0 %v47
    %v66 = vpop.f32.mrf.mxu0
    %v67 = vadd.f32 0.0, %v66
    %68 = vdwg.mxu0
    %vm69 = vcmask 261120
    %v71 = vsel %vm69, %v27, 0
    %73 = vmatpush.msra.mxu0 0.0
    %74 = vmatpush.msra.mxu0 0.0
    %75 = vmatpush.msra.mxu0 0.0
    %76 = vmatpush.msra.mxu0 0.0
    %77 = vmatpush.msra.mxu0 0.0
    %78 = vmatpush.msra.mxu0 0.0
    %79 = vmatpush.msra.mxu0 0.0
    %80 = vmatpush.msra.mxu0 0.0
    %81 = vmatpush.msra.mxu0 0.0
    %82 = vmatpush.msra.mxu0 0.0
    %83 = vmatpush.msra.mxu0 0.0
    %84 = vmatpush.msra.mxu0 0.0
    %85 = vmatpush.msra.mxu0 %v31
    %86 = vmatpush.msra.mxu0 %v30
    %87 = vmatpush.msra.mxu0 %v29
    %88 = vmatpush.msra.mxu0 %v28
    %89 = vmatmul.f32.gmra.mxu0 %v71
    %v90 = vpop.f32.mrf.mxu0
    %v91 = vadd.f32 %v67, %v90
    %92 = vdwg.mxu0
    %v93 = vld [vmem:[%s4] sm:$0x1]
    %v94 = vadd.f32 %v91, %v93
    %v95 = vmax.f32 %v94, 0.0
    %v96 = vld [vmem:[%s5] sm:$0xff]
    %v97 = vld [vmem:[%s5 + $0x8] sm:$0xff]
    %v98 = vld [vmem:[%s5 + $0x10] sm:$0xff]
    %v99 = vld [vmem:[%s5 + $0x18] sm:$0xff]
    %v100 = vld [vmem:[%s5 + $0x20] sm:$0xff]
    %v101 = vld [vmem:[%s5 + $0x28] sm:$0xff]
    %v102 = vld [vmem:[%s5 + $0x30] sm:$0xff]
    %v103 = vld [vmem:[%s5 + $0x38] sm:$0xff]
    %v104 = vld [vmem:[%s5 + $0x40] sm:$0xff]
    %v105 = vld [vmem:[%s5 + $0x48] sm:$0xff]
    %v106 = vld [vmem:[%s5 + $0x50] sm:$0xff]
    %v107 = vld [vmem:[%s5 + $0x58] sm:$0xff]
    %v108 = vld [vmem:[%s5 + $0x60] sm:$0xff]
    %v109 = vld [vmem:[%s5 + $0x68] sm:$0xff]
    %v110 = vld [vmem:[%s5 + $0x70] sm:$0xff]
    %v111 = vld [vmem:[%s5 + $0x78] sm:$0xff]
    %v112 = vld [vmem:[%s6] sm:$0x1]
    %113 = vmatpush.msra.mxu0 %v111
    %114 = vmatpush.msra.mxu0 %v110
    %115 = vmatpush.msra.mxu0 %v109
    %116 = vmatpush.msra.mxu0 %v108
    %117 = vmatpush.msra.mxu0 %v107
    %118 = vmatpush.msra.mxu0 %v106
    %119 = vmatpush.msra.mxu0 %v105
    %120 = vmatpush.msra.mxu0 %v104
    %121 = vmatpush.msra.mxu0 %v103
    %122 = vmatpush.msra.mxu0 %v102
    %123 = vmatpush.msra.mxu0 %v101
    %124 = vmatpush.msra.mxu0 %v100
    %125 = vmatpush.msra.mxu0 %v99
    %126 = vmatpush.msra.mxu0 %v98
    %127 = vmatpush.msra.mxu0 %v97
    %128 = vmatpush.msra.mxu0 %v96
    %129 = vmatmul.f32.gmra.mxu0 %v95
    %v130 = vpop.f32.mrf.mxu0
    %v131 = vadd.f32 %v112, %v130
    %132 = vdwg.mxu0
    %v133 = vmax.f32 %v131, 0.0
    %vm134 = vcmask 778240
    %135 = vst.msk [vmem:[#allocation2] sm:$0x1] %vm134, %v133
    // Predicated region
    $region30: #{tpu_custom_call.1} parent=1 // pred_check
      _
    $region31: #{tpu_custom_call.1} parent=1 // pred_check_branch
      %137 = sbr.rel (0) target = $region33
    $region32: #{tpu_custom_call.1} parent=1 // pred_region
      %139 = vsyncadd [#allocation3], 0
      %s141 = sshll.u32 [#allocation2], 4
      %s142 = int_to_ptr.vmem [resolvable:$true] %s141
      %s143 = sshll.u32 %s7, 4
      %s144 = int_to_ptr.hbm [resolvable:$true] %s143
      %146 = dma.vmem_to_hbm [thread:$0]  %s142, 16, %s144, [#allocation3]
    $region33: #{tpu_custom_call.1} parent=1 // pred_fallthru
      _
    // Predicated region
    $region34: #{tpu_custom_call.1} parent=1 // pred_check
      _
    $region35: #{tpu_custom_call.1} parent=1 // pred_check_branch
      %148 = sbr.rel (0) target = $region37
    $region36: #{tpu_custom_call.1} parent=1 // pred_region
      %150 = dma.done [#allocation3], 16
    $region37: #{tpu_custom_call.1} parent=1 // pred_fallthru
      _
    %151 = vsyncpa [#allocation3], 1

</llo_original>
